<compile_context>
chip_gen: v7x
topology: tpu7x:2x2x1
jax: 0.10.0
libtpu: 0.0.40
codegen_flags: <defaults>
</compile_context>

<pallas_src>
import functools

import jax
import jax.numpy as jnp
import numpy as np
from jax.experimental import pallas as pl
from jax.experimental.pallas import tpu as pltpu


def make_rope_tables(d_model: int, max_seq_len: int = 512):
    """Deterministic buffers, identical to the PyTorch __init__."""
    inv_freq = 1.0 / (10000.0 ** (jnp.arange(0, d_model, 2, dtype=jnp.float32) / d_model))
    pos = jnp.arange(0, max_seq_len, dtype=jnp.float32)
    pos_freq = jnp.outer(pos, inv_freq)            # (max_seq_len, d_model // 2)
    return jnp.cos(pos_freq), jnp.sin(pos_freq)


# ---------------------------------------------------------------------------
# One-time probe: pin down pltpu.roll's rotation direction so the ±1 pair-swap
# is convention-proof (cached; runs a tiny (8,128) kernel once).
# ---------------------------------------------------------------------------
_ROLL_FWD_SHIFT = None


def _roll_forward_shift() -> int:
    """Returns shift s such that pltpu.roll(x, s, axis=-1)[i] == x[i - 1]."""
    global _ROLL_FWD_SHIFT
    if _ROLL_FWD_SHIFT is None:
        def probe_kernel(x_ref, o_ref):
            o_ref[...] = pltpu.roll(x_ref[...], 1, axis=1)

        with jax.ensure_compile_time_eval():
            x = jnp.broadcast_to(jnp.arange(128, dtype=jnp.float32), (8, 128))
            y = pl.pallas_call(
                probe_kernel,
                out_shape=jax.ShapeDtypeStruct((8, 128), jnp.float32),
            )(x)
            moved_forward = float(np.asarray(y)[0, 1]) == 0.0  # did element 0 land in lane 1?
        _ROLL_FWD_SHIFT = 1 if moved_forward else -1
    return _ROLL_FWD_SHIFT


# ---------------------------------------------------------------------------
# Kernel
# ---------------------------------------------------------------------------
def _rope_kernel(shift_next, shift_prev, x_ref, cos_ref, sin_e_ref, sin_o_ref, o_ref):
    # Blocks: x/o (seq_tile, d_model) in x.dtype; tables (seq_tile, d_model) f32.
    x = x_ref[...].astype(jnp.float32)
    # Pair partner of lane i is i+1 (even i) / i-1 (odd i). Rolls hit the XLU
    # slot, which is idle in this memory-bound elementwise kernel.
    x_next = pltpu.roll(x, shift_next, axis=1)     # lane i holds x[i + 1]
    x_prev = pltpu.roll(x, shift_prev, axis=1)     # lane i holds x[i - 1]
    out = x * cos_ref[...] + x_next * sin_e_ref[...] + x_prev * sin_o_ref[...]
    o_ref[...] = out.astype(o_ref.dtype)


def _pick_seq_tile(seq_len, d_model, itemsize, target_bytes=1 << 20):
    """Largest seq tile (multiple of 8 that divides seq_len) whose activation block
    is about `target_bytes`; falls back to the full sequence."""
    if seq_len * d_model * itemsize <= target_bytes:
        return seq_len
    max_rows = max(8, target_bytes // (d_model * itemsize))
    t = (max_rows // 8) * 8
    while t >= 8:
        if seq_len % t == 0:
            return int(t)
        t -= 8
    return seq_len


def rope_forward(x, cos_pos, sin_pos):
    B, S, D = x.shape
    assert D % 2 == 0, "d_model must be even for RoPE"
    assert S <= cos_pos.shape[0], "seq_len exceeds max_seq_len of the RoPE tables"
    Dh = D // 2
    assert cos_pos.shape[1] == Dh and sin_pos.shape[1] == Dh

    # Lane-interleaved tables, shape (S, D). Tiny vs. activation traffic.
    cos = cos_pos[:S].astype(jnp.float32)
    sin = sin_pos[:S].astype(jnp.float32)
    zeros = jnp.zeros_like(sin)
    cos_il = jnp.repeat(cos, 2, axis=-1)                        # cos at lanes 2k and 2k+1
    sin_e = jnp.stack([-sin, zeros], axis=-1).reshape(S, D)     # -sin at even lanes
    sin_o = jnp.stack([zeros, sin], axis=-1).reshape(S, D)      # +sin at odd lanes

    fwd = _roll_forward_shift()
    shift_prev = fwd % D            # roll placing x[i-1] at lane i
    shift_next = (-fwd) % D         # roll placing x[i+1] at lane i

    itemsize = int(jnp.dtype(x.dtype).itemsize)
    tS = _pick_seq_tile(S, D, itemsize)
    grid = (B, S // tS)

    kernel = functools.partial(_rope_kernel, shift_next, shift_prev)

    x_spec = pl.BlockSpec((None, tS, D), lambda b, s: (b, s, 0))    # lane-dense, full D
    tab_spec = pl.BlockSpec((tS, D), lambda b, s: (s, 0))           # batch-independent -> no re-DMA per batch

    cost = pl.CostEstimate(
        flops=5 * B * S * D,
        transcendentals=0,
        bytes_accessed=2 * B * S * D * itemsize + 3 * B * S * D * 4,
    )

    return pl.pallas_call(
        kernel,
        out_shape=jax.ShapeDtypeStruct((B, S, D), x.dtype),
        grid=grid,
        in_specs=[x_spec, tab_spec, tab_spec, tab_spec],
        out_specs=x_spec,
        compiler_params=pltpu.CompilerParams(
            dimension_semantics=("parallel", "parallel"),
            vmem_limit_bytes=32 * 1024 * 1024,
        ),
        cost_estimate=cost,
    )(x, cos_il, sin_e, sin_o)


def rope_ref(x, cos_pos, sin_pos):
    """Pure-JAX reference mirroring the PyTorch forward exactly."""
    S = x.shape[1]
    cos = cos_pos[:S][None]
    sin = sin_pos[:S][None]
    x_even = x[..., 0::2]
    x_odd = x[..., 1::2]
    re = x_even * cos - x_odd * sin
    ro = x_odd * cos + x_even * sin
    out = jnp.zeros_like(x)
    out = out.at[..., 0::2].set(re)
    out = out.at[..., 1::2].set(ro)
    return out


if __name__ == "__main__":
    B, S, D = 2, 8, 128
    max_seq_len = 512

    cos_pos, sin_pos = make_rope_tables(D, max_seq_len)

    key = jax.random.PRNGKey(0)
    x = jax.random.normal(key, (B, S, D), dtype=jnp.float32)

    out = jax.block_until_ready(rope_forward(x, cos_pos, sin_pos))

    ref = rope_ref(x, cos_pos, sin_pos)
    np.testing.assert_allclose(np.asarray(out), np.asarray(ref), rtol=1e-5, atol=1e-5)

    print("KERNEL_OK")
</pallas_src>

<mosaic_0001>
module attributes {stable_mosaic.version = 11 : i64} {
  func.func @probe_kernel(%arg0: memref<8x128xf32, #tpu.memory_space<vmem>>, %arg1: memref<8x128xf32, #tpu.memory_space<vmem>>) attributes {dimension_semantics = [], scalar_prefetch = 0 : i64, scratch_operands = 0 : i64, tpu.core_type = #tpu.core_type<tc>} {
    %c0 = arith.constant 0 : index
    %c0_0 = arith.constant 0 : index
    %0 = vector.load %arg0[%c0, %c0_0] : memref<8x128xf32, #tpu.memory_space<vmem>>, vector<8x128xf32>
    %c1_i32 = arith.constant 1 : i32
    %1 = tpu.dynamic_rotate %0 by %c1_i32 dim 1 : vector<8x128xf32>, i32 -> vector<8x128xf32>
    %c0_1 = arith.constant 0 : index
    %c0_2 = arith.constant 0 : index
    %2 = vector.load %arg1[%c0_1, %c0_2] : memref<8x128xf32, #tpu.memory_space<vmem>>, vector<8x128xf32>
    tpu.vector_store %arg1[%c0_1, %c0_2], %1 {strides = array<i32>} : memref<8x128xf32, #tpu.memory_space<vmem>>, vector<8x128xf32>,
    return
  }
}

</mosaic_0001>

<llo_original>
// kernel: tpu_custom_call.1
$region0: #{tpu_custom_call.1}
  #allocation0 [shape = 'u32[]', space=smem, size = 0x4, offset = 0x4, fixed_abs, tag = 'smem constant byte address 0x4 - core index']
  #allocation1 [shape = 'u32[144,128]{1,0:T(1,128)}', space=vmem, size = 0x12000, scoped, tag = 'internal scratch']
  %s0 = inlined_call_operand.hbm [shape: f32[8,128], index: 0, kind: input, shape index: {}]
  %s1 = inlined_call_operand.hbm [shape: f32[8,128], index: 1, kind: output, shape index: {}]
  %s2 = sld [smem:[#allocation0]]
  $region18: #{tpu_custom_call.1} parent=0
    _
  %s4 = ssub.s32 1, %s2
  %s5 = scalar_select 0, %s4, %s2
  $region1: #{tpu_custom_call.1} parent=0
    #allocation2 [shape = 'u8[4096]{0}', space=vmem, size = 0x1000, scoped, tag = 'input window, operand 0, single buffered']
    #allocation3 [shape = 's32[1]{0}', space=sflag, size = 0x4, scoped, tag = 'scoped memory for tpu_custom_call.1']
    #allocation4 [shape = 's32[1]{0}', space=sflag, size = 0x4, scoped, tag = 'scoped memory for tpu_custom_call.1']
    #allocation5 [shape = 'u8[4096]{0}', space=vmem, size = 0x1000, scoped, tag = 'output window, operand 0, single buffered']
    %6 = vsyncpa [#allocation3], 0
    %7 = vsyncpa [#allocation4], 0
    // Predicated region
    $region2: #{tpu_custom_call.1} parent=1 // pred_check
      _
    $region3: #{tpu_custom_call.1} parent=1 // pred_check_branch
      %9 = sbr.rel (0) target = $region5
    $region4: #{tpu_custom_call.1} parent=1 // pred_region
      %s11 = ssub.s32 128, 128
      %12 = vsyncadd [#allocation3], %s11
      %s14 = sshll.u32 [#allocation2], 4
      %s15 = int_to_ptr.vmem [resolvable:$true] %s14
      %17 = dma.hbm_to_vmem [thread:$0]  %s0, 128, %s15, [#allocation3]
    $region5: #{tpu_custom_call.1} parent=1 // pred_fallthru
      _
    // Predicated region
    $region6: #{tpu_custom_call.1} parent=1 // pred_check
      _
    $region7: #{tpu_custom_call.1} parent=1 // pred_check_branch
      %19 = sbr.rel (0) target = $region9
    $region8: #{tpu_custom_call.1} parent=1 // pred_region
      %20 = dma.done [#allocation3], 128
    $region9: #{tpu_custom_call.1} parent=1 // pred_fallthru
      _
    %v21 = vld [vmem:[#allocation2] sm:$0xff]
    %22 = vrot.lane.b32.xlu0 %v21, 1
    %v23 = vpop.permute.xlu0 %22
    %24 = vst [vmem:[#allocation5] sm:$0xff] %v23
    // Predicated region
    $region10: #{tpu_custom_call.1} parent=1 // pred_check
      _
    $region11: #{tpu_custom_call.1} parent=1 // pred_check_branch
      %26 = sbr.rel (0) target = $region13
    $region12: #{tpu_custom_call.1} parent=1 // pred_region
      %s28 = ssub.s32 128, 128
      %29 = vsyncadd [#allocation4], %s28
      %s31 = sshll.u32 [#allocation5], 4
      %s32 = int_to_ptr.vmem [resolvable:$true] %s31
      %34 = dma.vmem_to_hbm [thread:$0]  %s32, 128, %s1, [#allocation4]
    $region13: #{tpu_custom_call.1} parent=1 // pred_fallthru
      _
    // Predicated region
    $region14: #{tpu_custom_call.1} parent=1 // pred_check
      _
    $region15: #{tpu_custom_call.1} parent=1 // pred_check_branch
      %36 = sbr.rel (0) target = $region17
    $region16: #{tpu_custom_call.1} parent=1 // pred_region
      %37 = dma.done [#allocation4], 128
    $region17: #{tpu_custom_call.1} parent=1 // pred_fallthru
      _
    %38 = vsyncpa [#allocation3], 1
    %39 = vsyncpa [#allocation4], 1

</llo_original>
